<compile_context>
chip_gen: v6e
topology: v6e:2x2x1
jax: 0.10.0
libtpu: 0.0.40
codegen_flags: <defaults>
</compile_context>

<pallas_src>
import functools
import math

import jax
import jax.numpy as jnp
from jax.experimental import pallas as pl
from jax.experimental.pallas import tpu as pltpu


def mask_generator_kernel(x_ref, w1_ref, w2_ref, b2_ref, o_ref, acc_ref,
                          *, hw, tile_hw, needs_mask):
    # x_ref : (B_TILE, C_in, TILE_HW)  spatial tile of flattened NCHW input
    # w1_ref: (C_in, hidden)           first Linear weight (transposed, no bias)
    # w2_ref: (hidden, C_out)          second Linear weight (transposed)
    # b2_ref: (1, C_out)               second Linear bias
    # o_ref : (B_TILE, C_out)          output mask (resident across spatial axis)
    # acc_ref: (B_TILE, C_in) f32      spatial-sum accumulator scratch
    k = pl.program_id(1)

    @pl.when(k == 0)
    def _init():
        acc_ref[...] = jnp.zeros_like(acc_ref)

    tile = x_ref[...]
    if needs_mask:
        # Mask lanes past the true H*W extent on the (possibly partial) tail tile.
        lane = jax.lax.broadcasted_iota(jnp.int32, tile.shape, tile.ndim - 1)
        valid = (k * tile_hw + lane) < hw
        tile = jnp.where(valid, tile, jnp.zeros_like(tile))

    # Accumulate the spatial sum in f32 (no full-tile f32 materialization needed
    # for f32 inputs; bf16 inputs accumulate safely in f32).
    acc_ref[...] += jnp.sum(tile, axis=-1, dtype=jnp.float32)

    @pl.when(k == pl.num_programs(1) - 1)
    def _finalize():
        # AdaptiveAvgPool2d(1): apply the 1/(H*W) scale once.
        pooled = acc_ref[...] * jnp.float32(1.0 / hw)
        # Linear(C_in -> hidden, bias=False) + ReLU
        h = jnp.dot(pooled, w1_ref[...].astype(jnp.float32),
                    preferred_element_type=jnp.float32)
        h = jnp.maximum(h, 0.0)
        # Linear(hidden -> C_out) with bias
        m = jnp.dot(h, w2_ref[...].astype(jnp.float32),
                    preferred_element_type=jnp.float32)
        m = m + b2_ref[...].astype(jnp.float32)
        # tanh then relu
        o_ref[...] = jnp.maximum(jnp.tanh(m), 0.0).astype(o_ref.dtype)


def _pick_tile_hw(hw, b_tile, c_in, itemsize, budget_bytes=8 << 20):
    """Largest lane tile (multiple of 128, capped at 2048) whose double-buffered
    input block fits the VMEM budget; falls back to the full spatial extent when
    it already fits in a single block."""
    max_lanes = budget_bytes // max(1, 2 * b_tile * c_in * itemsize)
    max_lanes = max(128, (max_lanes // 128) * 128)
    tile = min(2048, max_lanes)
    if hw <= tile:
        return hw  # one block covers all of H*W (full-dim block is always legal)
    return tile


def mask_generator_forward(x, w1, w2, b2, *, tile_hw=None):
    """x: (B, C_in, H, W) NCHW; returns (B, C_out)."""
    B, C, H, W = x.shape
    HW = H * W
    C_in, hidden = w1.shape
    C_out = w2.shape[1]

    x_flat = x.reshape(B, C, HW)
    b2_2d = b2.reshape(1, C_out)

    # Batch block: full batch when small, otherwise 8-row blocks (sublane-aligned).
    b_tile = B if B <= 8 else 8
    itemsize = x.dtype.itemsize
    if tile_hw is None:
        tile_hw = _pick_tile_hw(HW, b_tile, C, itemsize)
    n_b = pl.cdiv(B, b_tile)
    n_hw = pl.cdiv(HW, tile_hw)
    needs_mask = (HW % tile_hw) != 0

    kernel = functools.partial(mask_generator_kernel,
                               hw=HW, tile_hw=tile_hw, needs_mask=needs_mask)

    flops = 2 * B * C_in * hidden + 2 * B * hidden * C_out + B * C * HW
    bytes_accessed = (B * C * HW * itemsize
                      + w1.size * w1.dtype.itemsize
                      + w2.size * w2.dtype.itemsize
                      + b2.size * b2.dtype.itemsize
                      + B * C_out * x.dtype.itemsize)

    return pl.pallas_call(
        kernel,
        out_shape=jax.ShapeDtypeStruct((B, C_out), x.dtype),
        grid_spec=pltpu.PrefetchScalarGridSpec(
            num_scalar_prefetch=0,
            grid=(n_b, n_hw),
            in_specs=[
                pl.BlockSpec((b_tile, C, tile_hw), lambda b, k: (b, 0, k)),
                pl.BlockSpec((C_in, hidden), lambda b, k: (0, 0)),
                pl.BlockSpec((hidden, C_out), lambda b, k: (0, 0)),
                pl.BlockSpec((1, C_out), lambda b, k: (0, 0)),
            ],
            out_specs=pl.BlockSpec((b_tile, C_out), lambda b, k: (b, 0)),
            scratch_shapes=[pltpu.VMEM((b_tile, C), jnp.float32)],
        ),
        compiler_params=pltpu.CompilerParams(
            dimension_semantics=("parallel", "arbitrary"),
            vmem_limit_bytes=32 * 1024 * 1024,
        ),
        cost_estimate=pl.CostEstimate(
            flops=flops,
            transcendentals=B * C_out,
            bytes_accessed=bytes_accessed,
        ),
    )(x_flat, w1, w2, b2_2d)


def init_params(key, in_channels, out_channels):
    """Deterministic parameter init mirroring the PyTorch __init__ shapes.

    hidden = out_channels if out_channels < 128 else out_channels // 2
    Linear weights use kaiming_normal_ (fan_in, gain=sqrt(2)); second bias = 1.0.
    Weights are stored transposed as (in_features, out_features).
    """
    hidden = out_channels if out_channels < 128 else out_channels // 2
    k1, k2 = jax.random.split(key)

    std1 = math.sqrt(2.0 / in_channels)
    w1 = jax.random.normal(k1, (in_channels, hidden), dtype=jnp.float32) * std1

    std2 = math.sqrt(2.0 / hidden)
    w2 = jax.random.normal(k2, (hidden, out_channels), dtype=jnp.float32) * std2

    b2 = jnp.ones((out_channels,), dtype=jnp.float32)  # nn.init.constant_(bias, 1.0)
    return w1, w2, b2


def _reference(x, w1, w2, b2):
    B, C, H, W = x.shape
    pooled = jnp.mean(x.reshape(B, C, -1), axis=-1)
    return jnp.maximum(jnp.tanh(jnp.maximum(pooled @ w1, 0.0) @ w2 + b2), 0.0)


if __name__ == "__main__":
    key = jax.random.PRNGKey(0)
    kx, kp, kx2 = jax.random.split(key, 3)

    # Case 1: small canonical shape (single spatial block path).
    B, C_in, H, W = 2, 4, 16, 16
    C_out = 32  # < 128, so hidden = C_out
    x = jax.random.normal(kx, (B, C_in, H, W), dtype=jnp.float32)
    w1, w2, b2 = init_params(kp, C_in, C_out)

    out = mask_generator_forward(x, w1, w2, b2)
    out = jax.block_until_ready(out)
    ref = _reference(x, w1, w2, b2)
    assert out.shape == (B, C_out)
    assert jnp.allclose(out, ref, atol=1e-5, rtol=1e-5)

    # Case 2: non-divisible H*W with a forced small tile to exercise the
    # multi-step streaming reduction + tail-tile masking path.
    H2, W2 = 18, 14  # H*W = 252, tile 128 -> 2 steps, partial tail
    x2 = jax.random.normal(kx2, (B, C_in, H2, W2), dtype=jnp.float32)
    out2 = mask_generator_forward(x2, w1, w2, b2, tile_hw=128)
    out2 = jax.block_until_ready(out2)
    ref2 = _reference(x2, w1, w2, b2)
    assert out2.shape == (B, C_out)
    assert jnp.allclose(out2, ref2, atol=1e-5, rtol=1e-5)

    print("KERNEL_OK")
</pallas_src>

<mosaic_0001>
module attributes {stable_mosaic.version = 11 : i64} {
  func.func @mask_generator_kernel(%arg0: i32, %arg1: i32, %arg2: memref<2x4x256xf32, #tpu.memory_space<vmem>>, %arg3: memref<4x32xf32, #tpu.memory_space<vmem>>, %arg4: memref<32x32xf32, #tpu.memory_space<vmem>>, %arg5: memref<1x32xf32, #tpu.memory_space<vmem>>, %arg6: memref<2x32xf32, #tpu.memory_space<vmem>>, %arg7: memref<2x4xf32, #tpu.memory_space<vmem>>) attributes {dimension_semantics = [#tpu.dimension_semantics<parallel>, #tpu.dimension_semantics<arbitrary>], iteration_bounds = array<i64: 1, 1>, scalar_prefetch = 0 : i64, scratch_operands = 1 : i64, tpu.core_type = #tpu.core_type<tc>, window_params = [{transform_indices = @transform_0, window_bounds = array<i64: 2, 4, 256>}, {pipeline_mode = #tpu.pipeline_mode<synchronous>, transform_indices = @transform_1, window_bounds = array<i64: 4, 32>}, {pipeline_mode = #tpu.pipeline_mode<synchronous>, transform_indices = @transform_2, window_bounds = array<i64: 32, 32>}, {pipeline_mode = #tpu.pipeline_mode<synchronous>, transform_indices = @transform_3, window_bounds = array<i64: 1, 32>}, {transform_indices = @transform_4, window_bounds = array<i64: 2, 32>}]} {
    %c0_i32 = arith.constant 0 : i32
    %0 = arith.cmpi eq, %arg1, %c0_i32 : i32
    %1 = arith.extui %0 : i1 to i32
    %c0_i32_0 = arith.constant 0 : i32
    %2 = arith.cmpi ne, %1, %c0_i32_0 : i32
    scf.if %2 {
      %cst_9 = arith.constant 0.000000e+00 : f32
      %11 = vector.broadcast %cst_9 : f32 to vector<2x4xf32>
      %c0_10 = arith.constant 0 : index
      %c0_11 = arith.constant 0 : index
      %12 = vector.load %arg7[%c0_10, %c0_11] : memref<2x4xf32, #tpu.memory_space<vmem>>, vector<2x4xf32>
      tpu.vector_store %arg7[%c0_10, %c0_11], %11 {strides = array<i32>} : memref<2x4xf32, #tpu.memory_space<vmem>>, vector<2x4xf32>,
    } else {
    }
    %c0 = arith.constant 0 : index
    %c0_1 = arith.constant 0 : index
    %c0_2 = arith.constant 0 : index
    %3 = vector.load %arg2[%c0, %c0_1, %c0_2] : memref<2x4x256xf32, #tpu.memory_space<vmem>>, vector<2x4x256xf32>
    %c0_3 = arith.constant 0 : index
    %c0_4 = arith.constant 0 : index
    %4 = vector.load %arg7[%c0_3, %c0_4] : memref<2x4xf32, #tpu.memory_space<vmem>>, vector<2x4xf32>
    %cst = arith.constant dense<0.000000e+00> : vector<2x4xf32>
    %5 = vector.multi_reduction <add>, %3, %cst [2] : vector<2x4x256xf32> to vector<2x4xf32>
    %6 = arith.addf %4, %5 : vector<2x4xf32>
    %c0_5 = arith.constant 0 : index
    %c0_6 = arith.constant 0 : index
    %7 = vector.load %arg7[%c0_5, %c0_6] : memref<2x4xf32, #tpu.memory_space<vmem>>, vector<2x4xf32>
    tpu.vector_store %arg7[%c0_5, %c0_6], %6 {strides = array<i32>} : memref<2x4xf32, #tpu.memory_space<vmem>>, vector<2x4xf32>,
    %c0_i32_7 = arith.constant 0 : i32
    %8 = arith.cmpi eq, %arg1, %c0_i32_7 : i32
    %9 = arith.extui %8 : i1 to i32
    %c0_i32_8 = arith.constant 0 : i32
    %10 = arith.cmpi ne, %9, %c0_i32_8 : i32
    scf.if %10 {
      %c0_9 = arith.constant 0 : index
      %c0_10 = arith.constant 0 : index
      %11 = vector.load %arg7[%c0_9, %c0_10] : memref<2x4xf32, #tpu.memory_space<vmem>>, vector<2x4xf32>
      %cst_11 = arith.constant 3.906250e-03 : f32
      %12 = vector.broadcast %cst_11 : f32 to vector<2x4xf32>
      %13 = arith.mulf %11, %12 : vector<2x4xf32>
      %c0_12 = arith.constant 0 : index
      %c0_13 = arith.constant 0 : index
      %14 = vector.load %arg3[%c0_12, %c0_13] : memref<4x32xf32, #tpu.memory_space<vmem>>, vector<4x32xf32>
      %cst_14 = arith.constant dense<0.000000e+00> : vector<2x32xf32>
      %15 = tpu.matmul %13, %14, %cst_14 {dimension_numbers = #tpu.dot_dimension_numbers<[1], [0], [0], [1], [0, 0, 1, 1], [], []>} : vector<2x4xf32>, vector<4x32xf32>, vector<2x32xf32> -> vector<2x32xf32>
      %cst_15 = arith.constant 0.000000e+00 : f32
      %16 = vector.broadcast %cst_15 : f32 to vector<2x32xf32>
      %17 = arith.maximumf %15, %16 : vector<2x32xf32>
      %c0_16 = arith.constant 0 : index
      %c0_17 = arith.constant 0 : index
      %18 = vector.load %arg4[%c0_16, %c0_17] : memref<32x32xf32, #tpu.memory_space<vmem>>, vector<32x32xf32>
      %cst_18 = arith.constant dense<0.000000e+00> : vector<2x32xf32>
      %19 = tpu.matmul %17, %18, %cst_18 {dimension_numbers = #tpu.dot_dimension_numbers<[1], [0], [0], [1], [0, 0, 1, 1], [], []>} : vector<2x32xf32>, vector<32x32xf32>, vector<2x32xf32> -> vector<2x32xf32>
      %c0_19 = arith.constant 0 : index
      %c0_20 = arith.constant 0 : index
      %20 = vector.load %arg5[%c0_19, %c0_20] : memref<1x32xf32, #tpu.memory_space<vmem>>, vector<1x32xf32>
      %21 = vector.broadcast %20 : vector<1x32xf32> to vector<2x32xf32>
      %22 = arith.addf %19, %21 : vector<2x32xf32>
      %23 = math.tanh %22 : vector<2x32xf32>
      %cst_21 = arith.constant 0.000000e+00 : f32
      %24 = vector.broadcast %cst_21 : f32 to vector<2x32xf32>
      %25 = arith.maximumf %23, %24 : vector<2x32xf32>
      %c0_22 = arith.constant 0 : index
      %c0_23 = arith.constant 0 : index
      %26 = vector.load %arg6[%c0_22, %c0_23] : memref<2x32xf32, #tpu.memory_space<vmem>>, vector<2x32xf32>
      tpu.vector_store %arg6[%c0_22, %c0_23], %25 {strides = array<i32>} : memref<2x32xf32, #tpu.memory_space<vmem>>, vector<2x32xf32>,
    } else {
    }
    return
  }
  func.func @transform_0(%arg0: i32, %arg1: i32) -> (i32, i32, i32) {
    %c0_i32 = arith.constant 0 : i32
    %c0_i32_0 = arith.constant 0 : i32
    return %arg0, %c0_i32, %arg1 : i32, i32, i32
  }
  func.func @transform_1(%arg0: i32, %arg1: i32) -> (i32, i32) {
    %c0_i32 = arith.constant 0 : i32
    %c0_i32_0 = arith.constant 0 : i32
    %c0_i32_1 = arith.constant 0 : i32
    return %c0_i32, %c0_i32_0 : i32, i32
  }
  func.func @transform_2(%arg0: i32, %arg1: i32) -> (i32, i32) {
    %c0_i32 = arith.constant 0 : i32
    %c0_i32_0 = arith.constant 0 : i32
    %c0_i32_1 = arith.constant 0 : i32
    return %c0_i32, %c0_i32_0 : i32, i32
  }
  func.func @transform_3(%arg0: i32, %arg1: i32) -> (i32, i32) {
    %c0_i32 = arith.constant 0 : i32
    %c0_i32_0 = arith.constant 0 : i32
    %c0_i32_1 = arith.constant 0 : i32
    return %c0_i32, %c0_i32_0 : i32, i32
  }
  func.func @transform_4(%arg0: i32, %arg1: i32) -> (i32, i32) {
    %c0_i32 = arith.constant 0 : i32
    %c0_i32_0 = arith.constant 0 : i32
    return %arg0, %c0_i32 : i32, i32
  }
}

</mosaic_0001>

<llo_original>
// kernel: tpu_custom_call.1
$region0: #{tpu_custom_call.1}
  #allocation0 [shape = 'u32[]', space=smem, size = 0x4, offset = 0x4, fixed_abs, tag = 'smem constant byte address 0x4 - core index']
  #allocation1 [shape = 'u32[144,128]{1,0:T(1,128)}', space=vmem, size = 0x12000, scoped, tag = 'internal scratch']
  #allocation2 [shape = 'f32[2,4]{1,0:T(2,128)}', space=vmem, size = 0x400, scoped, tag = 'scratch operand']
  %s0 = inlined_call_operand.hbm [shape: f32[2,4,256], index: 0, kind: input, shape index: {}]
  %s1 = inlined_call_operand.hbm [shape: f32[4,32], index: 1, kind: input, shape index: {}]
  %s2 = inlined_call_operand.hbm [shape: f32[32,32], index: 2, kind: input, shape index: {}]
  %s3 = inlined_call_operand.vmem [shape: f32[1,32], index: 3, kind: input, shape index: {}]
  %s4 = inlined_call_operand.hbm [shape: f32[2,32], index: 4, kind: output, shape index: {}]
  %s5 = sld [smem:[#allocation0]]
  $region46: #{tpu_custom_call.1} parent=0
    _
  %s7 = ssub.s32 1, %s5
  %s8 = scalar_select 0, %s7, %s5
  $region1: #{tpu_custom_call.1} parent=0
    #allocation3 [shape = 'u8[8192]{0}', space=vmem, size = 0x2000, scoped, tag = 'input window, operand 0, single buffered']
    #allocation4 [shape = 's32[1]{0}', space=sflag, size = 0x4, scoped, tag = 'scoped memory for tpu_custom_call.1']
    #allocation5 [shape = 's32[1]{0}', space=sflag, size = 0x4, scoped, tag = 'scoped memory for tpu_custom_call.1']
    #allocation6 [shape = 'u8[2048]{0}', space=vmem, size = 0x800, scoped, tag = 'input window, operand 1, single buffered']
    #allocation7 [shape = 's32[1]{0}', space=sflag, size = 0x4, scoped, tag = 'scoped memory for tpu_custom_call.1']
    #allocation8 [shape = 'u8[16384]{0}', space=vmem, size = 0x4000, scoped, tag = 'input window, operand 2, single buffered']
    #allocation9 [shape = 'u8[1024]{0}', space=vmem, size = 0x400, scoped, tag = 'output window, operand 0, single buffered']
    %9 = vsyncpa [#allocation4], 0
    %10 = vsyncpa [#allocation7], 0
    %11 = vsyncpa [#allocation5], 0
    // Predicated region
    $region2: #{tpu_custom_call.1} parent=1 // pred_check
      _
    $region3: #{tpu_custom_call.1} parent=1 // pred_check_branch
      %13 = sbr.rel (0) target = $region5
    $region4: #{tpu_custom_call.1} parent=1 // pred_region
      %s15 = ssub.s32 256, 256
      %16 = vsyncadd [#allocation4], %s15
      %s17 = sshll.u32 [#allocation3], 4
      %s18 = int_to_ptr.vmem [resolvable:$true] %s17
      %23 = dma.hbm_to_vmem [thread:$0]  %s0, 256, %s18, [#allocation4], 128, 128, 8
    $region5: #{tpu_custom_call.1} parent=1 // pred_fallthru
      _
    // Predicated region
    $region6: #{tpu_custom_call.1} parent=1 // pred_check
      _
    $region7: #{tpu_custom_call.1} parent=1 // pred_check_branch
      %25 = sbr.rel (0) target = $region9
    $region8: #{tpu_custom_call.1} parent=1 // pred_region
      %s27 = ssub.s32 64, 64
      %28 = vsyncadd [#allocation7], %s27
      %s30 = sshll.u32 [#allocation6], 4
      %s31 = int_to_ptr.vmem [resolvable:$true] %s30
      %33 = dma.hbm_to_vmem [thread:$0]  %s1, 64, %s31, [#allocation7]
    $region9: #{tpu_custom_call.1} parent=1 // pred_fallthru
      _
    // Predicated region
    $region10: #{tpu_custom_call.1} parent=1 // pred_check
      _
    $region11: #{tpu_custom_call.1} parent=1 // pred_check_branch
      %35 = sbr.rel (0) target = $region13
    $region12: #{tpu_custom_call.1} parent=1 // pred_region
      %s37 = ssub.s32 512, 512
      %38 = vsyncadd [#allocation7], %s37
      %s39 = sshll.u32 [#allocation8], 4
      %s40 = int_to_ptr.vmem [resolvable:$true] %s39
      %45 = dma.hbm_to_vmem [thread:$0]  %s2, 512, %s40, [#allocation7], 128, 128, 8
    $region13: #{tpu_custom_call.1} parent=1 // pred_fallthru
      _
    // Predicated region
    $region14: #{tpu_custom_call.1} parent=1 // pred_check
      _
    $region15: #{tpu_custom_call.1} parent=1 // pred_check_branch
      %47 = sbr.rel (0) target = $region17
    $region16: #{tpu_custom_call.1} parent=1 // pred_region
      _
    $region17: #{tpu_custom_call.1} parent=1 // pred_fallthru
      _
    // Predicated region
    $region18: #{tpu_custom_call.1} parent=1 // pred_check
      _
    $region19: #{tpu_custom_call.1} parent=1 // pred_check_branch
      %49 = sbr.rel (0) target = $region21
    $region20: #{tpu_custom_call.1} parent=1 // pred_region
      %50 = dma.done [#allocation4], 256
    $region21: #{tpu_custom_call.1} parent=1 // pred_fallthru
      _
    // Predicated region
    $region22: #{tpu_custom_call.1} parent=1 // pred_check
      _
    $region23: #{tpu_custom_call.1} parent=1 // pred_check_branch
      %52 = sbr.rel (0) target = $region25
    $region24: #{tpu_custom_call.1} parent=1 // pred_region
      %53 = dma.done [#allocation7], 64
    $region25: #{tpu_custom_call.1} parent=1 // pred_fallthru
      _
    // Predicated region
    $region26: #{tpu_custom_call.1} parent=1 // pred_check
      _
    $region27: #{tpu_custom_call.1} parent=1 // pred_check_branch
      %55 = sbr.rel (0) target = $region29
    $region28: #{tpu_custom_call.1} parent=1 // pred_region
      %56 = dma.done [#allocation7], 512
    $region29: #{tpu_custom_call.1} parent=1 // pred_fallthru
      _
    %p57 = scmp.eq.s32.totalorder 0, 0
    // Predicated region
    $region30: #{tpu_custom_call.1} parent=1 // pred_check
      %p58 = pneg %p57
    $region31: #{tpu_custom_call.1} parent=1 // pred_check_branch
      %60 = sbr.rel (%p58) target = $region33
    $region32: #{tpu_custom_call.1} parent=1 // pred_region
      %vm61 = vcmask 25600
      %62 = vst.msk [vmem:[#allocation2] sm:$0x3] %vm61, 0.0
    $region33: #{tpu_custom_call.1} parent=1 // pred_fallthru
      _
    %v63 = vld [vmem:[#allocation3] sm:$0xff]
    %v64 = vld [vmem:[#allocation3 + $0x8] sm:$0xff]
    %v65 = vld [vmem:[#allocation2] sm:$0x3]
    %v68 = vcombine.high %v63, %v63
    %v69 = vcombine.high %v64, %v64
    %vm72 = vcmask 1043456
    %v73 = vsel %vm72, %v63, 0.0
    %v74 = vsel %vm72, %v68, 0.0
    %v75 = vadd.f32 %v73, %v74
    %76 = vadd.xlane.f32.xlu0 %v75
    %v77 = vpop.xlane.xlu0 %76
    %v78 = vsel %vm72, %v64, 0.0
    %v79 = vsel %vm72, %v69, 0.0
    %v80 = vadd.f32 %v78, %v79
    %81 = vadd.xlane.f32.xlu0 %v80
    %v82 = vpop.xlane.xlu0 %81
    %v85 = vlaneseq
    %v86 = vand.u32 %v85, 127
    %v87 = vlaneseq
    %v88 = vshrl.u32 %v87, 7
    %v89 = vsub.s32 %v86, %v88
    %v90 = vrot.slane %v77, %v89
    %v91 = vlaneseq
    %v92 = vshrl.u32 %v91, 7
    %v93 = vsub.s32 %v86, %v92
    %v94 = vrot.slane %v82, %v93
    %vm95 = vcmask 1041409
    %v96 = vsel %vm95, %v94, %v90
    %v98 = vadd.f32 %v65, %v96
    %vm99 = vcmask 25600
    %100 = vst.msk [vmem:[#allocation2] sm:$0x3] %vm99, %v98
    // Predicated region
    $region34: #{tpu_custom_call.1} parent=1 // pred_check
      %p101 = pneg %p57
    $region35: #{tpu_custom_call.1} parent=1 // pred_check_branch
      %103 = sbr.rel (%p101) target = $region37
    $region36: #{tpu_custom_call.1} parent=1 // pred_region
      %v104 = vld [vmem:[#allocation2] sm:$0x3]
      %v105 = vmul.f32 %v104, 0.00390625
      %v106 = vld [vmem:[#allocation6] sm:$0xf]
      %vm107 = vcmask 31744
      %v109 = vsel %vm107, %v105, 0
      %v112 = vsel %vm72, %v106, 0
      %114 = vmatprep.subr.mxu0 0.0
      %115 = vmatpush1.msra.mxu0 0.0
      %116 = vmatprep.subr.mxu0 0.0
      %117 = vmatpush1.msra.mxu0 0.0
      %118 = vmatprep.subr.mxu0 0.0
      %119 = vmatpush1.msra.mxu0 0.0
      %120 = vmatprep.subr.mxu0 0.0
      %121 = vmatpush1.msra.mxu0 0.0
      %122 = vmatprep.subr.mxu0 0.0
      %123 = vmatpush1.msra.mxu0 0.0
      %124 = vmatprep.subr.mxu0 0.0
      %125 = vmatpush1.msra.mxu0 0.0
      %126 = vmatprep.subr.mxu0 0.0
      %127 = vmatpush1.msra.mxu0 0.0
      %128 = vmatprep.subr.mxu0 0.0
      %129 = vmatpush1.msra.mxu0 0.0
      %130 = vmatprep.subr.mxu0 0.0
      %131 = vmatpush1.msra.mxu0 0.0
      %132 = vmatprep.subr.mxu0 0.0
      %133 = vmatpush1.msra.mxu0 0.0
      %134 = vmatprep.subr.mxu0 0.0
      %135 = vmatpush1.msra.mxu0 0.0
      %136 = vmatprep.subr.mxu0 0.0
      %137 = vmatpush1.msra.mxu0 0.0
      %138 = vmatprep.subr.mxu0 0.0
      %139 = vmatpush1.msra.mxu0 0.0
      %140 = vmatprep.subr.mxu0 0.0
      %141 = vmatpush1.msra.mxu0 0.0
      %142 = vmatprep.subr.mxu0 0.0
      %143 = vmatpush1.msra.mxu0 0.0
      %144 = vmatprep.subr.mxu0 0.0
      %145 = vmatpush1.msra.mxu0 %v112
      %146 = vmatprep.subr.mxu0 0.0
      %147 = vmatpush2.msra.mxu0 0.0
      %148 = vmatprep.subr.mxu0 0.0
      %149 = vmatpush2.msra.mxu0 0.0
      %150 = vmatprep.subr.mxu0 0.0
      %151 = vmatpush2.msra.mxu0 0.0
      %152 = vmatprep.subr.mxu0 0.0
      %153 = vmatpush2.msra.mxu0 0.0
      %154 = vmatprep.subr.mxu0 0.0
      %155 = vmatpush2.msra.mxu0 0.0
      %156 = vmatprep.subr.mxu0 0.0
      %157 = vmatpush2.msra.mxu0 0.0
      %158 = vmatprep.subr.mxu0 0.0
      %159 = vmatpush2.msra.mxu0 0.0
      %160 = vmatprep.subr.mxu0 0.0
      %161 = vmatpush2.msra.mxu0 0.0
      %162 = vmatprep.subr.mxu0 0.0
      %163 = vmatpush2.msra.mxu0 0.0
      %164 = vmatprep.subr.mxu0 0.0
      %165 = vmatpush2.msra.mxu0 0.0
      %166 = vmatprep.subr.mxu0 0.0
      %167 = vmatpush2.msra.mxu0 0.0
      %168 = vmatprep.subr.mxu0 0.0
      %169 = vmatpush2.msra.mxu0 0.0
      %170 = vmatprep.subr.mxu0 0.0
      %171 = vmatpush2.msra.mxu0 0.0
      %172 = vmatprep.subr.mxu0 0.0
      %173 = vmatpush2.msra.mxu0 0.0
      %174 = vmatprep.subr.mxu0 0.0
      %175 = vmatpush2.msra.mxu0 0.0
      %176 = vmatprep.subr.mxu0 0.0
      %177 = vmatpush2.msra.mxu0 0.0
      %178 = vmatprep.mubr.f32.mxu0 0.0
      %179 = vmatmul.mubr.f32.gmra.mxu0 %v109
      %v180 = vpop.f32.mrf.mxu0
      %v181 = vadd.f32 0.0, %v180
      %v182 = vpop.f32.mrf.mxu0
      %183 = vdwg.mxu0
      %v184 = vmax.f32 %v181, 0.0
      %v185 = vld [vmem:[#allocation8] sm:$0xff]
      %v186 = vld [vmem:[#allocation8 + $0x8] sm:$0xff]
      %v187 = vld [vmem:[#allocation8 + $0x10] sm:$0xff]
      %v188 = vld [vmem:[#allocation8 + $0x18] sm:$0xff]
      %v189 = vld [vmem:[%s3] sm:$0x1]
      %v191 = vlaneseq
      %v192 = vshrl.u32 %v191, 7
      %v193 = vsub.s32 0, %v192
      %v194 = vrot.slane %v189, %v193
      %vm196 = vcmask 261120
      %v198 = vsel %vm196, %v184, 0
      %200 = vmatprep.subr.mxu0 0.0
      %201 = vmatpush1.msra.mxu0 0.0
      %202 = vmatprep.subr.mxu0 0.0
      %203 = vmatpush1.msra.mxu0 0.0
      %204 = vmatprep.subr.mxu0 0.0
      %205 = vmatpush1.msra.mxu0 0.0
      %206 = vmatprep.subr.mxu0 0.0
      %207 = vmatpush1.msra.mxu0 0.0
      %208 = vmatprep.subr.mxu0 0.0
      %209 = vmatpush1.msra.mxu0 0.0
      %210 = vmatprep.subr.mxu0 0.0
      %211 = vmatpush1.msra.mxu0 0.0
      %212 = vmatprep.subr.mxu0 0.0
      %213 = vmatpush1.msra.mxu0 0.0
      %214 = vmatprep.subr.mxu0 0.0
      %215 = vmatpush1.msra.mxu0 0.0
      %216 = vmatprep.subr.mxu0 0.0
      %217 = vmatpush1.msra.mxu0 0.0
      %218 = vmatprep.subr.mxu0 0.0
      %219 = vmatpush1.msra.mxu0 0.0
      %220 = vmatprep.subr.mxu0 0.0
      %221 = vmatpush1.msra.mxu0 0.0
      %222 = vmatprep.subr.mxu0 0.0
      %223 = vmatpush1.msra.mxu0 0.0
      %224 = vmatprep.subr.mxu0 0.0
      %225 = vmatpush1.msra.mxu0 %v188
      %226 = vmatprep.subr.mxu0 0.0
      %227 = vmatpush1.msra.mxu0 %v187
      %228 = vmatprep.subr.mxu0 0.0
      %229 = vmatpush1.msra.mxu0 %v186
      %230 = vmatprep.subr.mxu0 0.0
      %231 = vmatpush1.msra.mxu0 %v185
      %232 = vmatprep.subr.mxu0 0.0
      %233 = vmatpush2.msra.mxu0 0.0
      %234 = vmatprep.subr.mxu0 0.0
      %235 = vmatpush2.msra.mxu0 0.0
      %236 = vmatprep.subr.mxu0 0.0
      %237 = vmatpush2.msra.mxu0 0.0
      %238 = vmatprep.subr.mxu0 0.0
      %239 = vmatpush2.msra.mxu0 0.0
      %240 = vmatprep.subr.mxu0 0.0
      %241 = vmatpush2.msra.mxu0 0.0
      %242 = vmatprep.subr.mxu0 0.0
      %243 = vmatpush2.msra.mxu0 0.0
      %244 = vmatprep.subr.mxu0 0.0
      %245 = vmatpush2.msra.mxu0 0.0
      %246 = vmatprep.subr.mxu0 0.0
      %247 = vmatpush2.msra.mxu0 0.0
      %248 = vmatprep.subr.mxu0 0.0
      %249 = vmatpush2.msra.mxu0 0.0
      %250 = vmatprep.subr.mxu0 0.0
      %251 = vmatpush2.msra.mxu0 0.0
      %252 = vmatprep.subr.mxu0 0.0
      %253 = vmatpush2.msra.mxu0 0.0
      %254 = vmatprep.subr.mxu0 0.0
      %255 = vmatpush2.msra.mxu0 0.0
      %256 = vmatprep.subr.mxu0 0.0
      %257 = vmatpush2.msra.mxu0 0.0
      %258 = vmatprep.subr.mxu0 0.0
      %259 = vmatpush2.msra.mxu0 0.0
      %260 = vmatprep.subr.mxu0 0.0
      %261 = vmatpush2.msra.mxu0 0.0
      %262 = vmatprep.subr.mxu0 0.0
      %263 = vmatpush2.msra.mxu0 0.0
      %264 = vmatprep.mubr.f32.mxu0 0.0
      %265 = vmatmul.mubr.f32.gmra.mxu0 %v198
      %v266 = vpop.f32.mrf.mxu0
      %v267 = vadd.f32 %v194, %v266
      %v268 = vpop.f32.mrf.mxu0
      %269 = vdwg.mxu0
      %v270 = vtanh.pop %v267
      %v271 = vmax.f32 %v270, 0.0
      %vm272 = vcmask 254976
      %273 = vst.msk [vmem:[#allocation9] sm:$0x3] %vm272, %v271
    $region37: #{tpu_custom_call.1} parent=1 // pred_fallthru
      _
    // Predicated region
    $region38: #{tpu_custom_call.1} parent=1 // pred_check
      _
    $region39: #{tpu_custom_call.1} parent=1 // pred_check_branch
      %275 = sbr.rel (0) target = $region41
    $region40: #{tpu_custom_call.1} parent=1 // pred_region
      %s277 = ssub.s32 32, 32
      %278 = vsyncadd [#allocation5], %s277
      %s280 = sshll.u32 [#allocation9], 4
      %s281 = int_to_ptr.vmem [resolvable:$true] %s280
      %283 = dma.vmem_to_hbm [thread:$0]  %s281, 32, %s4, [#allocation5]
    $region41: #{tpu_custom_call.1} parent=1 // pred_fallthru
      _
    // Predicated region
    $region42: #{tpu_custom_call.1} parent=1 // pred_check
      _
    $region43: #{tpu_custom_call.1} parent=1 // pred_check_branch
      %285 = sbr.rel (0) target = $region45
    $region44: #{tpu_custom_call.1} parent=1 // pred_region
      %286 = dma.done [#allocation5], 32
    $region45: #{tpu_custom_call.1} parent=1 // pred_fallthru
      _
    %287 = vsyncpa [#allocation4], 1
    %288 = vsyncpa [#allocation7], 1
    %289 = vsyncpa [#allocation5], 1

</llo_original>
